<compile_context>
chip_gen: v7x
topology: tpu7x:2x2x1
jax: 0.10.0
libtpu: 0.0.40
codegen_flags: <defaults>
</compile_context>

<pallas_src>
import jax
import jax.numpy as jnp
from jax.experimental import pallas as pl
from jax.experimental.pallas import tpu as pltpu

_COMPUTE_DTYPE = jnp.float32     # TPU-supported stand-in for torch.float64
_TARGET_TILE_BYTES = 8 << 20     # ~8 MiB f32 output per tile (fits all chips)


def _identity_cast_kernel(x_ref, o_ref):
    # The entire forward of `Net`: identity copy + dtype widening, done
    # in-vreg on the VPU while streaming the tile through VMEM.
    o_ref[...] = x_ref[...].astype(o_ref.dtype)


def _tiled_identity_cast(x2):
    """x2: 2-D (rows, cols) array with cols on the lane axis. Returns f32 copy."""
    rows, cols = x2.shape

    # Row tile: aim for ~8 MiB of f32 output per block, rounded to a multiple
    # of 8 (sublane).  Small arrays fall back to a single full-extent block
    # (always a legal block shape regardless of the (8,128) constraint).
    bytes_per_row = max(cols * 4, 1)
    tile_r = min(rows, max(1, _TARGET_TILE_BYTES // bytes_per_row))
    if tile_r >= 8:
        tile_r = (tile_r // 8) * 8
    else:
        tile_r = rows

    grid = (pl.cdiv(rows, tile_r),)

    return pl.pallas_call(
        _identity_cast_kernel,
        out_shape=jax.ShapeDtypeStruct((rows, cols), _COMPUTE_DTYPE),
        grid=grid,
        in_specs=[pl.BlockSpec((tile_r, cols), lambda i: (i, 0))],
        out_specs=pl.BlockSpec((tile_r, cols), lambda i: (i, 0)),
        compiler_params=pltpu.CompilerParams(
            # "parallel": shards the copy across both TensorCores on v7x;
            # harmless no-op on single-TC v5e/v6e.
            dimension_semantics=("parallel",),
            # Headroom for double-buffered in+out ~8 MiB tiles on every chip
            # (well under v7x's 64 MiB physical VMEM).
            vmem_limit_bytes=48 << 20,
        ),
    )(x2)


def net_forward(x):
    """Pallas equivalent of Net.forward: identity copy with dtype widening.

    x: (B, D, N) array (any float/int dtype).
    returns: same shape; float32 on TPU (widened to float64 on host only when
             jax_enable_x64 is enabled).
    """
    x = jnp.asarray(x)
    want_x64 = bool(jax.config.read("jax_enable_x64"))

    # Short-circuit: for f32 input with no f64 widening requested the op is a
    # pure identity — launching a kernel would be a full HBM read+write for
    # zero semantic effect.
    if x.dtype == _COMPUTE_DTYPE and not want_x64:
        return x

    if x.ndim == 0 or x.size == 0:
        out = x.astype(_COMPUTE_DTYPE)
    else:
        orig_shape = x.shape
        cols = orig_shape[-1]
        rows = x.size // cols
        out = _tiled_identity_cast(x.reshape(rows, cols)).reshape(orig_shape)

    if want_x64:
        # Second full-tensor XLA pass; only performed when the caller truly
        # needs float64 on host (matches torch.float64 semantics).
        out = out.astype(jnp.float64)
    return out


if __name__ == "__main__":
    key = jax.random.PRNGKey(0)
    # batchsize * vector-dimension * n  -> (1, d, n); small, tile-friendly.
    x_f32 = jax.random.normal(key, (1, 8, 128), dtype=jnp.float32)
    # Non-f32 input exercises the real in-kernel widening path.
    x_bf16 = x_f32.astype(jnp.bfloat16)

    out = net_forward(x_bf16)
    jax.block_until_ready(out)

    assert out.shape == x_bf16.shape
    assert jnp.allclose(out.astype(jnp.float32),
                        x_bf16.astype(jnp.float32), atol=0.0, rtol=0.0)

    # f32 path: identity short-circuit (no kernel launch), still exact.
    out_id = net_forward(x_f32)
    jax.block_until_ready(out_id)
    assert out_id.shape == x_f32.shape
    assert jnp.allclose(out_id.astype(jnp.float32), x_f32, atol=0.0, rtol=0.0)

    print("KERNEL_OK")
</pallas_src>

<mosaic_0001>
module attributes {stable_mosaic.version = 11 : i64} {
  func.func @_identity_cast_kernel(%arg0: i32, %arg1: memref<8x128xbf16, #tpu.memory_space<vmem>>, %arg2: memref<8x128xf32, #tpu.memory_space<vmem>>) attributes {dimension_semantics = [#tpu.dimension_semantics<parallel>], iteration_bounds = array<i64: 1>, scalar_prefetch = 0 : i64, scratch_operands = 0 : i64, tpu.core_type = #tpu.core_type<tc>, window_params = [{transform_indices = @transform_0, window_bounds = array<i64: 8, 128>}, {transform_indices = @transform_1, window_bounds = array<i64: 8, 128>}]} {
    %c0 = arith.constant 0 : index
    %c0_0 = arith.constant 0 : index
    %0 = vector.load %arg1[%c0, %c0_0] : memref<8x128xbf16, #tpu.memory_space<vmem>>, vector<8x128xbf16>
    %1 = arith.extf %0 : vector<8x128xbf16> to vector<8x128xf32>
    %c0_1 = arith.constant 0 : index
    %c0_2 = arith.constant 0 : index
    %2 = vector.load %arg2[%c0_1, %c0_2] : memref<8x128xf32, #tpu.memory_space<vmem>>, vector<8x128xf32>
    tpu.vector_store %arg2[%c0_1, %c0_2], %1 {strides = array<i32>} : memref<8x128xf32, #tpu.memory_space<vmem>>, vector<8x128xf32>,
    return
  }
  func.func @transform_0(%arg0: i32) -> (i32, i32) {
    %c0_i32 = arith.constant 0 : i32
    %c0_i32_0 = arith.constant 0 : i32
    return %arg0, %c0_i32 : i32, i32
  }
  func.func @transform_1(%arg0: i32) -> (i32, i32) {
    %c0_i32 = arith.constant 0 : i32
    %c0_i32_0 = arith.constant 0 : i32
    return %arg0, %c0_i32 : i32, i32
  }
}

</mosaic_0001>

<llo_original>
// kernel: tpu_custom_call.1
$region0: #{tpu_custom_call.1}
  #allocation0 [shape = 'u32[]', space=smem, size = 0x4, offset = 0x4, fixed_abs, tag = 'smem constant byte address 0x4 - core index']
  #allocation1 [shape = 'u32[144,128]{1,0:T(1,128)}', space=vmem, size = 0x12000, scoped, tag = 'internal scratch']
  %s0 = inlined_call_operand.hbm [shape: bf16[8,128], index: 0, kind: input, shape index: {}]
  %s1 = inlined_call_operand.hbm [shape: f32[8,128], index: 1, kind: output, shape index: {}]
  %s2 = sld [smem:[#allocation0]]
  $region18: #{tpu_custom_call.1} parent=0
    _
  %s4 = ssub.s32 1, %s2
  %s5 = scalar_select 0, %s4, %s2
  $region1: #{tpu_custom_call.1} parent=0
    #allocation2 [shape = 'u8[2048]{0}', space=vmem, size = 0x800, scoped, tag = 'input window, operand 0, single buffered']
    #allocation3 [shape = 's32[1]{0}', space=sflag, size = 0x4, scoped, tag = 'scoped memory for tpu_custom_call.1']
    #allocation4 [shape = 's32[1]{0}', space=sflag, size = 0x4, scoped, tag = 'scoped memory for tpu_custom_call.1']
    #allocation5 [shape = 'u8[4096]{0}', space=vmem, size = 0x1000, scoped, tag = 'output window, operand 0, single buffered']
    %6 = vsyncpa [#allocation3], 0
    %7 = vsyncpa [#allocation4], 0
    // Predicated region
    $region2: #{tpu_custom_call.1} parent=1 // pred_check
      _
    $region3: #{tpu_custom_call.1} parent=1 // pred_check_branch
      %9 = sbr.rel (0) target = $region5
    $region4: #{tpu_custom_call.1} parent=1 // pred_region
      %s11 = ssub.s32 64, 64
      %12 = vsyncadd [#allocation3], %s11
      %s14 = sshll.u32 [#allocation2], 4
      %s15 = int_to_ptr.vmem [resolvable:$true] %s14
      %17 = dma.hbm_to_vmem [thread:$0]  %s0, 64, %s15, [#allocation3]
    $region5: #{tpu_custom_call.1} parent=1 // pred_fallthru
      _
    // Predicated region
    $region6: #{tpu_custom_call.1} parent=1 // pred_check
      _
    $region7: #{tpu_custom_call.1} parent=1 // pred_check_branch
      %19 = sbr.rel (0) target = $region9
    $region8: #{tpu_custom_call.1} parent=1 // pred_region
      %20 = dma.done [#allocation3], 64
    $region9: #{tpu_custom_call.1} parent=1 // pred_fallthru
      _
    %v21 = vld [vmem:[#allocation2] sm:$0xf]
    %v22 = vunpack.c.l.bf16 %v21
    %23 = vst [vmem:[#allocation5] sm:$0xff] %v22
    // Predicated region
    $region10: #{tpu_custom_call.1} parent=1 // pred_check
      _
    $region11: #{tpu_custom_call.1} parent=1 // pred_check_branch
      %25 = sbr.rel (0) target = $region13
    $region12: #{tpu_custom_call.1} parent=1 // pred_region
      %s27 = ssub.s32 128, 128
      %28 = vsyncadd [#allocation4], %s27
      %s30 = sshll.u32 [#allocation5], 4
      %s31 = int_to_ptr.vmem [resolvable:$true] %s30
      %33 = dma.vmem_to_hbm [thread:$0]  %s31, 128, %s1, [#allocation4]
    $region13: #{tpu_custom_call.1} parent=1 // pred_fallthru
      _
    // Predicated region
    $region14: #{tpu_custom_call.1} parent=1 // pred_check
      _
    $region15: #{tpu_custom_call.1} parent=1 // pred_check_branch
      %35 = sbr.rel (0) target = $region17
    $region16: #{tpu_custom_call.1} parent=1 // pred_region
      %36 = dma.done [#allocation4], 128
    $region17: #{tpu_custom_call.1} parent=1 // pred_fallthru
      _
    %37 = vsyncpa [#allocation3], 1
    %38 = vsyncpa [#allocation4], 1

</llo_original>
